<compile_context>
chip_gen: v7x
topology: tpu7x:2x2x1
jax: 0.10.0
libtpu: 0.0.40
codegen_flags: <defaults>
</compile_context>

<pallas_src>
import math

import jax
import jax.numpy as jnp
from jax import lax
from jax.experimental import pallas as pl
from jax.experimental.pallas import tpu as pltpu


def _round_up(a, b):
    return ((a + b - 1) // b) * b


def _linear_kernel(x_ref, w_ref, b_ref, o_ref):
    # x_ref: (TM, K)   w_ref: (N, K)   b_ref: (1, N)   o_ref: (TM, N)
    # Contract x's dim 1 against w's dim 1 (i.e. x @ w.T) directly on the MXU;
    # no transpose is ever materialized.
    acc = lax.dot_general(
        x_ref[...], w_ref[...],
        dimension_numbers=(((1,), (1,)), ((), ())),
        preferred_element_type=jnp.float32,
    )
    o_ref[...] = (acc + b_ref[...]).astype(o_ref.dtype)


def simple_linear_regression_forward(x, weight, bias, *, batch_tile=16384,
                                      stream_bf16=False):
    """x: (B, IN); weight: (OUT, IN) (native PyTorch layout); bias: (OUT,)."""
    B, IN = x.shape
    OUT, IN_w = weight.shape
    assert IN == IN_w, "weight must be (output_size, input_size)"
    out_dtype = x.dtype

    # --- Lane-dense row packing --------------------------------------------
    # Pack `pack` consecutive rows of x into one row: (B, IN) -> (B/pack, pack*IN)
    # is a free row-major reshape.  The matching weight is block-diagonal with
    # `pack` copies of W, so each packed output row holds `pack` result rows.
    pack = 4 if B % 4 == 0 else (2 if B % 2 == 0 else 1)
    Bp = B // pack
    K = pack * IN          # contraction width seen by the kernel (128 for IN=32)
    N = pack * OUT         # output width seen by the kernel (32 for OUT=8)

    if pack > 1:
        wblk = jnp.kron(jnp.eye(pack, dtype=weight.dtype), weight)   # (N, K)
        bias_p = jnp.tile(bias, pack)
    else:
        wblk = weight
        bias_p = bias
    b2 = bias_p.reshape(1, N).astype(jnp.float32)

    xp = x.reshape(Bp, K)
    if stream_bf16:
        xp = xp.astype(jnp.bfloat16)
        wblk = wblk.astype(jnp.bfloat16)

    out_shape = jax.ShapeDtypeStruct((Bp, N), out_dtype)
    in_itemsize = jnp.dtype(xp.dtype).itemsize
    out_itemsize = jnp.dtype(out_dtype).itemsize

    # --- Small / toy path: single block, no grid machinery at all. ---------
    small = (B <= batch_tile) and (B * (IN * in_itemsize + OUT * out_itemsize)
                                   <= (8 << 20))
    if small:
        yp = pl.pallas_call(_linear_kernel, out_shape=out_shape)(xp, wblk, b2)
        return yp.reshape(B, OUT)

    # --- Scaled path: tile the (packed) batch axis only. -------------------
    # Keep >= ~4 grid steps so "parallel" actually shards across v7x's 2 TCs.
    step = 8 * pack
    tile_rows = _round_up(max(min(batch_tile, _round_up(pl.cdiv(B, 4), step)),
                              step), step)
    tile_p = tile_rows // pack
    grid = (pl.cdiv(Bp, tile_p),)

    # Explicit VMEM budget (v5e scoped default is only 16 MiB).
    in_tile_bytes = tile_p * K * in_itemsize
    out_tile_bytes = tile_p * N * out_itemsize
    resident_bytes = wblk.size * jnp.dtype(wblk.dtype).itemsize + b2.size * 4
    est = 2 * (in_tile_bytes + out_tile_bytes) + resident_bytes
    vmem_limit = int(min(48 << 20, max(est + (4 << 20), 16 << 20)))

    yp = pl.pallas_call(
        _linear_kernel,
        out_shape=out_shape,
        grid=grid,
        in_specs=[
            pl.BlockSpec((tile_p, K), lambda i: (i, 0)),
            pl.BlockSpec((N, K), lambda i: (0, 0)),     # resident in VMEM
            pl.BlockSpec((1, N), lambda i: (0, 0)),     # resident in VMEM
        ],
        out_specs=pl.BlockSpec((tile_p, N), lambda i: (i, 0)),
        compiler_params=pltpu.CompilerParams(
            dimension_semantics=("parallel",),   # 2x on v7x (2 TCs); free elsewhere
            vmem_limit_bytes=vmem_limit,
        ),
    )(xp, wblk, b2)
    return yp.reshape(B, OUT)


if __name__ == "__main__":
    # Shapes consistent with the module: Linear(input_size=32, output_size=8)
    batch, input_size, output_size = 4, 32, 8

    key = jax.random.PRNGKey(0)
    kx, kw, kb, kx2, kx3 = jax.random.split(key, 5)

    # Deterministic init mimicking torch.nn.Linear: U(-1/sqrt(in), 1/sqrt(in))
    bound = 1.0 / math.sqrt(input_size)
    weight = jax.random.uniform(kw, (output_size, input_size),
                                minval=-bound, maxval=bound, dtype=jnp.float32)
    bias = jax.random.uniform(kb, (output_size,),
                              minval=-bound, maxval=bound, dtype=jnp.float32)
    x = jax.random.normal(kx, (batch, input_size), dtype=jnp.float32)

    # Small path (grid-less single block, lane-packed).
    y = simple_linear_regression_forward(x, weight, bias)
    jax.block_until_ready(y)
    y_ref = x @ weight.T + bias
    assert y.shape == (batch, output_size)
    assert jnp.allclose(y, y_ref, atol=1e-4, rtol=1e-4)

    # Batch-tiled path (small batch_tile to force a multi-step grid).
    x_big = jax.random.normal(kx2, (1024, input_size), dtype=jnp.float32)
    y_big = simple_linear_regression_forward(x_big, weight, bias, batch_tile=256)
    jax.block_until_ready(y_big)
    y_big_ref = x_big @ weight.T + bias
    assert jnp.allclose(y_big, y_big_ref, atol=1e-4, rtol=1e-4)

    # Ragged cdiv grid (B not a multiple of the tile): last block is clipped.
    x_rag = jax.random.normal(kx3, (1000, input_size), dtype=jnp.float32)
    y_rag = simple_linear_regression_forward(x_rag, weight, bias, batch_tile=256)
    jax.block_until_ready(y_rag)
    y_rag_ref = x_rag @ weight.T + bias
    assert y_rag.shape == (1000, output_size)
    assert jnp.allclose(y_rag, y_rag_ref, atol=1e-4, rtol=1e-4)

    print("KERNEL_OK")
</pallas_src>

<mosaic_0001>
module attributes {stable_mosaic.version = 11 : i64} {
  func.func @_linear_kernel(%arg0: memref<1x128xf32, #tpu.memory_space<vmem>>, %arg1: memref<32x128xf32, #tpu.memory_space<vmem>>, %arg2: memref<1x32xf32, #tpu.memory_space<vmem>>, %arg3: memref<1x32xf32, #tpu.memory_space<vmem>>) attributes {dimension_semantics = [], scalar_prefetch = 0 : i64, scratch_operands = 0 : i64, tpu.core_type = #tpu.core_type<tc>} {
    %c0 = arith.constant 0 : index
    %c0_0 = arith.constant 0 : index
    %0 = vector.load %arg0[%c0, %c0_0] : memref<1x128xf32, #tpu.memory_space<vmem>>, vector<1x128xf32>
    %c0_1 = arith.constant 0 : index
    %c0_2 = arith.constant 0 : index
    %1 = vector.load %arg1[%c0_1, %c0_2] : memref<32x128xf32, #tpu.memory_space<vmem>>, vector<32x128xf32>
    %cst = arith.constant dense<0.000000e+00> : vector<1x32xf32>
    %2 = tpu.matmul %0, %1, %cst {dimension_numbers = #tpu.dot_dimension_numbers<[1], [1], [0], [0], [0, 0, 1, 0], [], []>} : vector<1x128xf32>, vector<32x128xf32>, vector<1x32xf32> -> vector<1x32xf32>
    %c0_3 = arith.constant 0 : index
    %c0_4 = arith.constant 0 : index
    %3 = vector.load %arg2[%c0_3, %c0_4] : memref<1x32xf32, #tpu.memory_space<vmem>>, vector<1x32xf32>
    %4 = arith.addf %2, %3 : vector<1x32xf32>
    %c0_5 = arith.constant 0 : index
    %c0_6 = arith.constant 0 : index
    %5 = vector.load %arg3[%c0_5, %c0_6] : memref<1x32xf32, #tpu.memory_space<vmem>>, vector<1x32xf32>
    tpu.vector_store %arg3[%c0_5, %c0_6], %4 {strides = array<i32>} : memref<1x32xf32, #tpu.memory_space<vmem>>, vector<1x32xf32>,
    return
  }
}

</mosaic_0001>

<llo_original>
// kernel: tpu_custom_call.1
$region0: #{tpu_custom_call.1}
  #allocation0 [shape = 'u32[]', space=smem, size = 0x4, offset = 0x4, fixed_abs, tag = 'smem constant byte address 0x4 - core index']
  #allocation1 [shape = 'u32[144,128]{1,0:T(1,128)}', space=vmem, size = 0x12000, scoped, tag = 'internal scratch']
  %s0 = inlined_call_operand.hbm [shape: f32[1,128], index: 0, kind: input, shape index: {}]
  %s1 = inlined_call_operand.hbm [shape: f32[32,128], index: 1, kind: input, shape index: {}]
  %s2 = inlined_call_operand.vmem [shape: f32[1,32], index: 2, kind: input, shape index: {}]
  %s3 = inlined_call_operand.hbm [shape: f32[1,32], index: 3, kind: output, shape index: {}]
  %s4 = sld [smem:[#allocation0]]
  $region30: #{tpu_custom_call.1} parent=0
    _
  %s6 = ssub.s32 1, %s4
  %s7 = scalar_select 0, %s6, %s4
  $region1: #{tpu_custom_call.1} parent=0
    #allocation2 [shape = 'u8[512]{0}', space=vmem, size = 0x400, scoped, tag = 'input window, operand 0, single buffered']
    #allocation3 [shape = 's32[1]{0}', space=sflag, size = 0x4, scoped, tag = 'scoped memory for tpu_custom_call.1']
    #allocation4 [shape = 's32[1]{0}', space=sflag, size = 0x4, scoped, tag = 'scoped memory for tpu_custom_call.1']
    #allocation5 [shape = 'u8[16384]{0}', space=vmem, size = 0x4000, scoped, tag = 'input window, operand 1, single buffered']
    #allocation6 [shape = 's32[1]{0}', space=sflag, size = 0x4, scoped, tag = 'scoped memory for tpu_custom_call.1']
    #allocation7 [shape = 'u8[512]{0}', space=vmem, size = 0x400, scoped, tag = 'output window, operand 0, single buffered']
    %8 = vsyncpa [#allocation3], 0
    %9 = vsyncpa [#allocation6], 0
    %10 = vsyncpa [#allocation4], 0
    // Predicated region
    $region2: #{tpu_custom_call.1} parent=1 // pred_check
      _
    $region3: #{tpu_custom_call.1} parent=1 // pred_check_branch
      %12 = sbr.rel (0) target = $region5
    $region4: #{tpu_custom_call.1} parent=1 // pred_region
      %s14 = ssub.s32 16, 16
      %15 = vsyncadd [#allocation3], %s14
      %s17 = sshll.u32 [#allocation2], 4
      %s18 = int_to_ptr.vmem [resolvable:$true] %s17
      %20 = dma.hbm_to_vmem [thread:$0]  %s0, 16, %s18, [#allocation3]
    $region5: #{tpu_custom_call.1} parent=1 // pred_fallthru
      _
    // Predicated region
    $region6: #{tpu_custom_call.1} parent=1 // pred_check
      _
    $region7: #{tpu_custom_call.1} parent=1 // pred_check_branch
      %22 = sbr.rel (0) target = $region9
    $region8: #{tpu_custom_call.1} parent=1 // pred_region
      %s24 = ssub.s32 512, 512
      %25 = vsyncadd [#allocation6], %s24
      %s26 = sshll.u32 [#allocation5], 4
      %s27 = int_to_ptr.vmem [resolvable:$true] %s26
      %32 = dma.hbm_to_vmem [thread:$0]  %s1, 512, %s27, [#allocation6], 128, 128, 8
    $region9: #{tpu_custom_call.1} parent=1 // pred_fallthru
      _
    // Predicated region
    $region10: #{tpu_custom_call.1} parent=1 // pred_check
      _
    $region11: #{tpu_custom_call.1} parent=1 // pred_check_branch
      %34 = sbr.rel (0) target = $region13
    $region12: #{tpu_custom_call.1} parent=1 // pred_region
      _
    $region13: #{tpu_custom_call.1} parent=1 // pred_fallthru
      _
    // Predicated region
    $region14: #{tpu_custom_call.1} parent=1 // pred_check
      _
    $region15: #{tpu_custom_call.1} parent=1 // pred_check_branch
      %36 = sbr.rel (0) target = $region17
    $region16: #{tpu_custom_call.1} parent=1 // pred_region
      %37 = dma.done [#allocation3], 16
    $region17: #{tpu_custom_call.1} parent=1 // pred_fallthru
      _
    // Predicated region
    $region18: #{tpu_custom_call.1} parent=1 // pred_check
      _
    $region19: #{tpu_custom_call.1} parent=1 // pred_check_branch
      %39 = sbr.rel (0) target = $region21
    $region20: #{tpu_custom_call.1} parent=1 // pred_region
      %40 = dma.done [#allocation6], 512
    $region21: #{tpu_custom_call.1} parent=1 // pred_fallthru
      _
    %v41 = vld [vmem:[#allocation2] sm:$0x1]
    %v42 = vld [vmem:[#allocation5] sm:$0xff]
    %v43 = vld [vmem:[#allocation5 + $0x8] sm:$0xff]
    %v44 = vld [vmem:[#allocation5 + $0x10] sm:$0xff]
    %v45 = vld [vmem:[#allocation5 + $0x18] sm:$0xff]
    %v46 = vld [vmem:[%s2] sm:$0x1]
    %47 = vmatprep.subr.mxu0 0.0
    %48 = vmatpush1.xpose.msra.mxu0 %v42
    %49 = vmatprep.subr.mxu0 0.0
    %50 = vmatpush1.xpose.msra.mxu0 %v43
    %51 = vmatprep.subr.mxu0 0.0
    %52 = vmatpush1.xpose.msra.mxu0 %v44
    %53 = vmatprep.subr.mxu0 0.0
    %54 = vmatpush1.xpose.msra.mxu0 %v45
    %55 = vmatprep.subr.mxu0 0.0
    %56 = vmatpush1.xpose.msra.mxu0 0.0
    %57 = vmatprep.subr.mxu0 0.0
    %58 = vmatpush1.xpose.msra.mxu0 0.0
    %59 = vmatprep.subr.mxu0 0.0
    %60 = vmatpush1.xpose.msra.mxu0 0.0
    %61 = vmatprep.subr.mxu0 0.0
    %62 = vmatpush1.xpose.msra.mxu0 0.0
    %63 = vmatprep.subr.mxu0 0.0
    %64 = vmatpush1.xpose.msra.mxu0 0.0
    %65 = vmatprep.subr.mxu0 0.0
    %66 = vmatpush1.xpose.msra.mxu0 0.0
    %67 = vmatprep.subr.mxu0 0.0
    %68 = vmatpush1.xpose.msra.mxu0 0.0
    %69 = vmatprep.subr.mxu0 0.0
    %70 = vmatpush1.xpose.msra.mxu0 0.0
    %71 = vmatprep.subr.mxu0 0.0
    %72 = vmatpush1.xpose.msra.mxu0 0.0
    %73 = vmatprep.subr.mxu0 0.0
    %74 = vmatpush1.xpose.msra.mxu0 0.0
    %75 = vmatprep.subr.mxu0 0.0
    %76 = vmatpush1.xpose.msra.mxu0 0.0
    %77 = vmatprep.subr.mxu0 0.0
    %78 = vmatpush1.xpose.msra.mxu0 0.0
    %79 = vmatprep.subr.mxu0 0.0
    %80 = vmatpush1.xpose.msra.mxu0 0.0
    %81 = vmatprep.subr.mxu0 0.0
    %82 = vmatpush1.xpose.msra.mxu0 0.0
    %83 = vmatprep.subr.mxu0 0.0
    %84 = vmatpush1.xpose.msra.mxu0 0.0
    %85 = vmatprep.subr.mxu0 0.0
    %86 = vmatpush1.xpose.msra.mxu0 0.0
    %87 = vmatprep.subr.mxu0 0.0
    %88 = vmatpush1.xpose.msra.mxu0 0.0
    %89 = vmatprep.subr.mxu0 0.0
    %90 = vmatpush1.xpose.msra.mxu0 0.0
    %91 = vmatprep.subr.mxu0 0.0
    %92 = vmatpush1.xpose.msra.mxu0 0.0
    %93 = vmatprep.subr.mxu0 0.0
    %94 = vmatpush1.xpose.msra.mxu0 0.0
    %95 = vmatprep.subr.mxu0 0.0
    %96 = vmatpush1.xpose.msra.mxu0 0.0
    %97 = vmatprep.subr.mxu0 0.0
    %98 = vmatpush1.xpose.msra.mxu0 0.0
    %99 = vmatprep.subr.mxu0 0.0
    %100 = vmatpush1.xpose.msra.mxu0 0.0
    %101 = vmatprep.subr.mxu0 0.0
    %102 = vmatpush1.xpose.msra.mxu0 0.0
    %103 = vmatprep.subr.mxu0 0.0
    %104 = vmatpush1.xpose.msra.mxu0 0.0
    %105 = vmatprep.subr.mxu0 0.0
    %106 = vmatpush1.xpose.msra.mxu0 0.0
    %107 = vmatprep.subr.mxu0 0.0
    %108 = vmatpush1.xpose.msra.mxu0 0.0
    %109 = vmatprep.subr.mxu0 0.0
    %110 = vmatpush1.xpose.msra.mxu0 0.0
    %111 = vmatprep.mubr.f32.mxu0 0.0
    %112 = vmatmul.mubr.f32.gmra.mrb[0].mxu0 %v41
    %v113 = vpop.f32.mrb[0].mxu0
    %v114 = vadd.f32 %v46, %v113
    %v115 = vpop.f32.mrb[0].mxu0
    %116 = vdwg.mxu0
    %vm117 = vcmask 253952
    %118 = vst.msk [vmem:[#allocation7] sm:$0x1] %vm117, %v114
    // Predicated region
    $region22: #{tpu_custom_call.1} parent=1 // pred_check
      _
    $region23: #{tpu_custom_call.1} parent=1 // pred_check_branch
      %120 = sbr.rel (0) target = $region25
    $region24: #{tpu_custom_call.1} parent=1 // pred_region
      %s122 = ssub.s32 16, 16
      %123 = vsyncadd [#allocation4], %s122
      %s125 = sshll.u32 [#allocation7], 4
      %s126 = int_to_ptr.vmem [resolvable:$true] %s125
      %128 = dma.vmem_to_hbm [thread:$0]  %s126, 16, %s3, [#allocation4]
    $region25: #{tpu_custom_call.1} parent=1 // pred_fallthru
      _
    // Predicated region
    $region26: #{tpu_custom_call.1} parent=1 // pred_check
      _
    $region27: #{tpu_custom_call.1} parent=1 // pred_check_branch
      %130 = sbr.rel (0) target = $region29
    $region28: #{tpu_custom_call.1} parent=1 // pred_region
      %131 = dma.done [#allocation4], 16
    $region29: #{tpu_custom_call.1} parent=1 // pred_fallthru
      _
    %132 = vsyncpa [#allocation3], 1
    %133 = vsyncpa [#allocation6], 1
    %134 = vsyncpa [#allocation4], 1

</llo_original>
